<compile_context>
chip_gen: v7x
topology: tpu7x:2x2x1
jax: 0.10.0
libtpu: 0.0.40
codegen_flags: <defaults>
</compile_context>

<pallas_src>
import functools

import jax
import jax.numpy as jnp
from jax.experimental import pallas as pl
from jax.experimental.pallas import tpu as pltpu


def _round_up(v: int, m: int) -> int:
    return ((v + m - 1) // m) * m


def _ls_ce_tile_kernel(x_ref, t_ref, o_ref, *, epsilon: float, num_class: int,
                       tile_n: int, total_n: int):
    x = x_ref[...].astype(jnp.float32)            # (tile_n, C)
    t = t_ref[...]                                # (tile_n, 1) int32

    # Ragged-tail row mask: rows past the true N (padded garbage in the last
    # tile) must not contribute.  jnp.where is a select, so even NaN/Inf
    # produced by garbage rows is dropped from the forward value.
    row = jax.lax.broadcasted_iota(jnp.int32, (tile_n, 1), 0)
    gid = pl.program_id(0) * tile_n + row
    valid = gid < total_n                         # (tile_n, 1) bool

    # Numerically stable log-softmax pieces; only the max is an XLU reduction.
    m = jnp.max(x, axis=1, keepdims=True)         # (tile_n, 1)   XLU
    z = x - m                                     # (tile_n, C)   VPU
    exp_z = jnp.exp(z)                            # (tile_n, C)   EUP

    # Smoothed-label weights built with a cheap VPU compare/select; note that
    # out-of-range targets (>= num_class) silently get weight `off` everywhere
    # (PyTorch's scatter_ would error instead).
    off = jnp.float32(epsilon / (num_class - 1))
    conf = jnp.float32(1.0 - epsilon)
    col = jax.lax.broadcasted_iota(jnp.int32, x.shape, 1)   # (tile_n, C)
    w = jnp.where(col == t, conf, off)            # (tile_n, C)   VPU

    # Row-sums on the otherwise-idle MXU: A @ ones(C, 1).
    ones_c = jnp.ones((num_class, 1), dtype=jnp.float32)
    sum_exp = jnp.dot(exp_z, ones_c, preferred_element_type=jnp.float32)   # (tile_n, 1)
    sum_zw = jnp.dot(z * w, ones_c, preferred_element_type=jnp.float32)    # (tile_n, 1)

    # Fused per-row loss: since sum_j(w) == 1,  loss_i = lse_i - rowsum(z*w)_i.
    per_row = jnp.log(sum_exp) - sum_zw           # (tile_n, 1)
    per_row = jnp.where(valid, per_row, 0.0)

    # One f32 partial sum per tile -> (1, 1, 1) output block (tiny store).
    o_ref[0] = jnp.sum(per_row, axis=0, keepdims=True)      # (1, 1)


def label_smoothing_ce_loss(x, target, *, epsilon=0.01, num_class=20,
                            max_tile_n=4096):
    """x: (N, num_class) float; target: (N,) int. Returns scalar float32 loss."""
    n, c = x.shape
    assert c == num_class, (c, num_class)
    t2d = target.astype(jnp.int32).reshape(n, 1)

    # Sublane packing of the input dtype: 8 rows/vreg for 4-byte, 16 for 2-byte.
    itemsize = jnp.dtype(x.dtype).itemsize
    sub = 8 if itemsize >= 4 else (16 if itemsize == 2 else 32)
    tile_n = _round_up(min(max_tile_n, n), sub)
    num_tiles = pl.cdiv(n, tile_n)

    kernel = functools.partial(
        _ls_ce_tile_kernel,
        epsilon=float(epsilon),
        num_class=int(num_class),
        tile_n=tile_n,
        total_n=n,
    )

    partials = pl.pallas_call(
        kernel,
        out_shape=jax.ShapeDtypeStruct((num_tiles, 1, 1), jnp.float32),
        grid=(num_tiles,),
        in_specs=[
            pl.BlockSpec((tile_n, num_class), lambda i: (i, 0)),
            pl.BlockSpec((tile_n, 1), lambda i: (i, 0)),
        ],
        # 3-D output so the last two block dims equal the full array dims;
        # each grid step writes its own (1,1,1) partial-sum slot.
        out_specs=pl.BlockSpec((1, 1, 1), lambda i: (i, 0, 0)),
        compiler_params=pltpu.CompilerParams(
            # Tiles are independent -> shard across both TensorCores on v7x.
            dimension_semantics=("parallel",),
            # Padded working set at tile_n=4096 is ~18 MiB; 32 MiB is safe on
            # every generation (raises v5e's 16 MiB default, v7x's default).
            vmem_limit_bytes=32 * 1024 * 1024,
        ),
    )(x, t2d)

    # Sum num_tiles partials (tiny) and apply the single global 1/N once.
    return jnp.sum(partials) / jnp.float32(n)


def _reference(x, target, *, epsilon=0.01, num_class=20):
    n = x.shape[0]
    off = epsilon / (num_class - 1)
    smoothed = jnp.full((n, num_class), off, dtype=jnp.float32)
    smoothed = smoothed.at[jnp.arange(n), target].set(1.0 - epsilon)
    log_prob = jax.nn.log_softmax(x.astype(jnp.float32), axis=1)
    return -jnp.sum(log_prob * smoothed) / n


if __name__ == "__main__":
    key = jax.random.PRNGKey(0)
    kx, kt, kx2, kt2 = jax.random.split(key, 4)

    # Small case matching the module defaults: batch=8, num_class=20.
    N, C = 8, 20
    x = jax.random.normal(kx, (N, C), dtype=jnp.float32)
    target = jax.random.randint(kt, (N,), 0, C, dtype=jnp.int32)

    loss = label_smoothing_ce_loss(x, target, epsilon=0.01, num_class=C)
    jax.block_until_ready(loss)
    ref = _reference(x, target, epsilon=0.01, num_class=C)
    assert jnp.allclose(loss, ref, rtol=1e-5, atol=1e-5), (loss, ref)

    # Multi-tile case with a ragged last tile (exercises pipelining, the
    # per-tile partial-sum output, and the row mask).
    N2 = 200
    x2 = jax.random.normal(kx2, (N2, C), dtype=jnp.float32)
    target2 = jax.random.randint(kt2, (N2,), 0, C, dtype=jnp.int32)

    loss2 = label_smoothing_ce_loss(x2, target2, epsilon=0.01, num_class=C,
                                    max_tile_n=64)
    jax.block_until_ready(loss2)
    ref2 = _reference(x2, target2, epsilon=0.01, num_class=C)
    assert jnp.allclose(loss2, ref2, rtol=1e-5, atol=1e-5), (loss2, ref2)

    print("KERNEL_OK")
</pallas_src>

<mosaic_0001>
module attributes {stable_mosaic.version = 11 : i64} {
  func.func @_ls_ce_tile_kernel(%arg0: i32, %arg1: memref<8x20xf32, #tpu.memory_space<vmem>>, %arg2: memref<8x1xi32, #tpu.memory_space<vmem>>, %arg3: memref<1x1x1xf32, #tpu.memory_space<vmem>>) attributes {dimension_semantics = [#tpu.dimension_semantics<parallel>], iteration_bounds = array<i64: 1>, scalar_prefetch = 0 : i64, scratch_operands = 0 : i64, tpu.core_type = #tpu.core_type<tc>, window_params = [{transform_indices = @transform_0, window_bounds = array<i64: 8, 20>}, {transform_indices = @transform_1, window_bounds = array<i64: 8, 1>}, {transform_indices = @transform_2, window_bounds = array<i64: 1, 1, 1>}]} {
    %c0 = arith.constant 0 : index
    %c0_0 = arith.constant 0 : index
    %0 = vector.load %arg1[%c0, %c0_0] : memref<8x20xf32, #tpu.memory_space<vmem>>, vector<8x20xf32>
    %c0_1 = arith.constant 0 : index
    %c0_2 = arith.constant 0 : index
    %1 = vector.load %arg2[%c0_1, %c0_2] : memref<8x1xi32, #tpu.memory_space<vmem>>, vector<8x1xi32>
    %2 = tpu.iota {dimensions = array<i32: 0>} : vector<8x1xi32>
    %c8_i32 = arith.constant 8 : i32
    %3 = arith.muli %arg0, %c8_i32 : i32
    %4 = vector.broadcast %3 : i32 to vector<8x1xi32>
    %5 = arith.addi %4, %2 : vector<8x1xi32>
    %c8_i32_3 = arith.constant 8 : i32
    %6 = vector.broadcast %c8_i32_3 : i32 to vector<8x1xi32>
    %7 = arith.cmpi slt, %5, %6 : vector<8x1xi32>
    %cst = arith.constant dense<0xFF800000> : vector<8xf32>
    %8 = vector.multi_reduction <maximumf>, %0, %cst [1] : vector<8x20xf32> to vector<8xf32>
    %9 = vector.shape_cast %8 : vector<8xf32> to vector<8x1xf32>
    %10 = vector.broadcast %9 : vector<8x1xf32> to vector<8x20xf32>
    %11 = arith.subf %0, %10 : vector<8x20xf32>
    %12 = math.exp %11 : vector<8x20xf32>
    %13 = tpu.iota {dimensions = array<i32: 1>} : vector<8x20xi32>
    %14 = vector.broadcast %1 : vector<8x1xi32> to vector<8x20xi32>
    %15 = arith.cmpi eq, %13, %14 : vector<8x20xi32>
    %cst_4 = arith.constant 9.900000e-01 : f32
    %cst_5 = arith.constant 5.26315765E-4 : f32
    %16 = vector.broadcast %cst_4 : f32 to vector<8x20xf32>
    %17 = vector.broadcast %cst_5 : f32 to vector<8x20xf32>
    %18 = arith.select %15, %16, %17 : vector<8x20xi1>, vector<8x20xf32>
    %cst_6 = arith.constant 1.000000e+00 : f32
    %19 = vector.broadcast %cst_6 : f32 to vector<20x1xf32>
    %cst_7 = arith.constant dense<0.000000e+00> : vector<8x1xf32>
    %20 = tpu.matmul %12, %19, %cst_7 {dimension_numbers = #tpu.dot_dimension_numbers<[1], [0], [0], [1], [0, 0, 1, 1], [], []>} : vector<8x20xf32>, vector<20x1xf32>, vector<8x1xf32> -> vector<8x1xf32>
    %21 = arith.mulf %11, %18 : vector<8x20xf32>
    %cst_8 = arith.constant dense<0.000000e+00> : vector<8x1xf32>
    %22 = tpu.matmul %21, %19, %cst_8 {dimension_numbers = #tpu.dot_dimension_numbers<[1], [0], [0], [1], [0, 0, 1, 1], [], []>} : vector<8x20xf32>, vector<20x1xf32>, vector<8x1xf32> -> vector<8x1xf32>
    %23 = math.log %20 : vector<8x1xf32>
    %24 = arith.subf %23, %22 : vector<8x1xf32>
    %cst_9 = arith.constant 0.000000e+00 : f32
    %25 = vector.broadcast %cst_9 : f32 to vector<8x1xf32>
    %26 = arith.select %7, %24, %25 : vector<8x1xi1>, vector<8x1xf32>
    %cst_10 = arith.constant dense<0.000000e+00> : vector<1xf32>
    %27 = vector.multi_reduction <add>, %26, %cst_10 [0] : vector<8x1xf32> to vector<1xf32>
    %28 = vector.shape_cast %27 : vector<1xf32> to vector<1x1xf32>
    %c0_11 = arith.constant 0 : index
    %c0_12 = arith.constant 0 : index
    %c0_13 = arith.constant 0 : index
    %29 = vector.load %arg3[%c0_11, %c0_12, %c0_13] : memref<1x1x1xf32, #tpu.memory_space<vmem>>, vector<1x1x1xf32>
    %30 = vector.shape_cast %29 : vector<1x1x1xf32> to vector<1x1xf32>
    %31 = vector.shape_cast %28 : vector<1x1xf32> to vector<1x1x1xf32>
    tpu.vector_store %arg3[%c0_11, %c0_12, %c0_13], %31 {strides = array<i32>} : memref<1x1x1xf32, #tpu.memory_space<vmem>>, vector<1x1x1xf32>,
    return
  }
  func.func @transform_0(%arg0: i32) -> (i32, i32) {
    %c0_i32 = arith.constant 0 : i32
    %c0_i32_0 = arith.constant 0 : i32
    return %arg0, %c0_i32 : i32, i32
  }
  func.func @transform_1(%arg0: i32) -> (i32, i32) {
    %c0_i32 = arith.constant 0 : i32
    %c0_i32_0 = arith.constant 0 : i32
    return %arg0, %c0_i32 : i32, i32
  }
  func.func @transform_2(%arg0: i32) -> (i32, i32, i32) {
    %c0_i32 = arith.constant 0 : i32
    %c0_i32_0 = arith.constant 0 : i32
    %c0_i32_1 = arith.constant 0 : i32
    return %arg0, %c0_i32, %c0_i32_0 : i32, i32, i32
  }
}

</mosaic_0001>

<llo_original>
// kernel: tpu_custom_call.1
$region0: #{tpu_custom_call.1}
  #allocation0 [shape = 'u32[]', space=smem, size = 0x4, offset = 0x4, fixed_abs, tag = 'smem constant byte address 0x4 - core index']
  #allocation1 [shape = 'u32[144,128]{1,0:T(1,128)}', space=vmem, size = 0x12000, scoped, tag = 'internal scratch']
  %s0 = inlined_call_operand.vmem [shape: f32[8,20], index: 0, kind: input, shape index: {}]
  %s1 = inlined_call_operand.vmem [shape: s32[8,1], index: 1, kind: input, shape index: {}]
  %s2 = inlined_call_operand.hbm [shape: f32[1,1,1], index: 2, kind: output, shape index: {}]
  %s3 = sld [smem:[#allocation0]]
  $region18: #{tpu_custom_call.1} parent=0
    _
  %s5 = ssub.s32 1, %s3
  %s6 = scalar_select 0, %s5, %s3
  $region1: #{tpu_custom_call.1} parent=0
    #allocation2 [shape = 'u8[512]{0}', space=vmem, size = 0x400, scoped, tag = 'output window, operand 0, single buffered']
    #allocation3 [shape = 's32[1]{0}', space=sflag, size = 0x4, scoped, tag = 'scoped memory for tpu_custom_call.1']
    %7 = vsyncpa [#allocation3], 0
    // Predicated region
    $region2: #{tpu_custom_call.1} parent=1 // pred_check
      _
    $region3: #{tpu_custom_call.1} parent=1 // pred_check_branch
      %9 = sbr.rel (0) target = $region5
    $region4: #{tpu_custom_call.1} parent=1 // pred_region
      _
    $region5: #{tpu_custom_call.1} parent=1 // pred_fallthru
      _
    // Predicated region
    $region6: #{tpu_custom_call.1} parent=1 // pred_check
      _
    $region7: #{tpu_custom_call.1} parent=1 // pred_check_branch
      %11 = sbr.rel (0) target = $region9
    $region8: #{tpu_custom_call.1} parent=1 // pred_region
      _
    $region9: #{tpu_custom_call.1} parent=1 // pred_fallthru
      _
    %v12 = vld [vmem:[%s0] sm:$0xff]
    %v13 = vld [vmem:[%s1] sm:$0xff]
    %v14 = vlaneseq
    %v15 = vshrl.u32 %v14, 7
    %s16 = smul.u32 0, 8
    %v17 = vstv %s16
    %v18 = vadd.s32 %v17, %v15
    %vm19 = vcmp.lt.s32.totalorder %v18, 8
    %vm20 = vcmask 162816
    %v21 = vsel %vm20, %v12, -inf
    %22 = vmax.xlane.f32.xlu0 %v21
    %v23 = vpop.xlane.xlu0 %22
    %v24 = vsub.f32 %v12, %v23
    %v25 = vmul.f32 %v24, 1.442695
    %v26 = vpow.pop %v25
    %v27 = vlaneseq
    %v28 = vand.u32 %v27, 127
    %29 = vset.pattern.permute.xlu0 0
    %30 = vperm.xlu0 %29, %v13
    %v31 = vpop.permute.xlu0 %30
    %vm32 = vcmp.eq.s32.totalorder %v28, %v31
    %v33 = vsel %vm32, 0.99, 0.00052631577
    %v35 = vsel %vm20, %v26, 0
    %vm37 = vcmask 1043456
    %v39 = vsel %vm37, 1.0, 0
    %41 = vmatprep.subr.mxu0 0.0
    %42 = vmatpush1.msra.mxu0 1.0
    %43 = vmatprep.subr.mxu0 0.0
    %44 = vmatpush1.msra.mxu0 1.0
    %45 = vmatprep.subr.mxu0 0.0
    %46 = vmatpush1.msra.mxu0 %v39
    %47 = vmatprep.subr.mxu0 0.0
    %48 = vmatpush1.msra.mxu0 0.0
    %49 = vmatprep.subr.mxu0 0.0
    %50 = vmatpush1.msra.mxu0 0.0
    %51 = vmatprep.subr.mxu0 0.0
    %52 = vmatpush1.msra.mxu0 0.0
    %53 = vmatprep.subr.mxu0 0.0
    %54 = vmatpush1.msra.mxu0 0.0
    %55 = vmatprep.subr.mxu0 0.0
    %56 = vmatpush1.msra.mxu0 0.0
    %57 = vmatprep.subr.mxu0 0.0
    %58 = vmatpush1.msra.mxu0 0.0
    %59 = vmatprep.subr.mxu0 0.0
    %60 = vmatpush1.msra.mxu0 0.0
    %61 = vmatprep.subr.mxu0 0.0
    %62 = vmatpush1.msra.mxu0 0.0
    %63 = vmatprep.subr.mxu0 0.0
    %64 = vmatpush1.msra.mxu0 0.0
    %65 = vmatprep.subr.mxu0 0.0
    %66 = vmatpush1.msra.mxu0 0.0
    %67 = vmatprep.subr.mxu0 0.0
    %68 = vmatpush1.msra.mxu0 0.0
    %69 = vmatprep.subr.mxu0 0.0
    %70 = vmatpush1.msra.mxu0 0.0
    %71 = vmatprep.subr.mxu0 0.0
    %72 = vmatpush1.msra.mxu0 0.0
    %73 = vmatprep.subr.mxu0 0.0
    %74 = vmatpush1.msra.mxu0 0.0
    %75 = vmatprep.subr.mxu0 0.0
    %76 = vmatpush1.msra.mxu0 0.0
    %77 = vmatprep.subr.mxu0 0.0
    %78 = vmatpush1.msra.mxu0 0.0
    %79 = vmatprep.subr.mxu0 0.0
    %80 = vmatpush1.msra.mxu0 0.0
    %81 = vmatprep.subr.mxu0 0.0
    %82 = vmatpush1.msra.mxu0 0.0
    %83 = vmatprep.subr.mxu0 0.0
    %84 = vmatpush1.msra.mxu0 0.0
    %85 = vmatprep.subr.mxu0 0.0
    %86 = vmatpush1.msra.mxu0 0.0
    %87 = vmatprep.subr.mxu0 0.0
    %88 = vmatpush1.msra.mxu0 0.0
    %89 = vmatprep.subr.mxu0 0.0
    %90 = vmatpush1.msra.mxu0 0.0
    %91 = vmatprep.subr.mxu0 0.0
    %92 = vmatpush1.msra.mxu0 0.0
    %93 = vmatprep.subr.mxu0 0.0
    %94 = vmatpush1.msra.mxu0 0.0
    %95 = vmatprep.subr.mxu0 0.0
    %96 = vmatpush1.msra.mxu0 0.0
    %97 = vmatprep.subr.mxu0 0.0
    %98 = vmatpush1.msra.mxu0 0.0
    %99 = vmatprep.subr.mxu0 0.0
    %100 = vmatpush1.msra.mxu0 0.0
    %101 = vmatprep.subr.mxu0 0.0
    %102 = vmatpush1.msra.mxu0 0.0
    %103 = vmatprep.subr.mxu0 0.0
    %104 = vmatpush1.msra.mxu0 0.0
    %105 = vmatprep.mubr.f32.mxu0 0.0
    %106 = vmatmul.mubr.f32.gmra.mrb[0].mxu0 %v35
    %v107 = vpop.f32.mrb[0].mxu0
    %v108 = vadd.f32 0.0, %v107
    %v109 = vpop.f32.mrb[0].mxu0
    %110 = vdwg.mxu0
    %v111 = vmul.f32 %v24, %v33
    %v113 = vsel %vm20, %v111, 0
    %115 = vmatprep.subr.mxu0 0.0
    %116 = vmatpush1.msra.mxu0 1.0
    %117 = vmatprep.subr.mxu0 0.0
    %118 = vmatpush1.msra.mxu0 1.0
    %119 = vmatprep.subr.mxu0 0.0
    %120 = vmatpush1.msra.mxu0 %v39
    %121 = vmatprep.subr.mxu0 0.0
    %122 = vmatpush1.msra.mxu0 0.0
    %123 = vmatprep.subr.mxu0 0.0
    %124 = vmatpush1.msra.mxu0 0.0
    %125 = vmatprep.subr.mxu0 0.0
    %126 = vmatpush1.msra.mxu0 0.0
    %127 = vmatprep.subr.mxu0 0.0
    %128 = vmatpush1.msra.mxu0 0.0
    %129 = vmatprep.subr.mxu0 0.0
    %130 = vmatpush1.msra.mxu0 0.0
    %131 = vmatprep.subr.mxu0 0.0
    %132 = vmatpush1.msra.mxu0 0.0
    %133 = vmatprep.subr.mxu0 0.0
    %134 = vmatpush1.msra.mxu0 0.0
    %135 = vmatprep.subr.mxu0 0.0
    %136 = vmatpush1.msra.mxu0 0.0
    %137 = vmatprep.subr.mxu0 0.0
    %138 = vmatpush1.msra.mxu0 0.0
    %139 = vmatprep.subr.mxu0 0.0
    %140 = vmatpush1.msra.mxu0 0.0
    %141 = vmatprep.subr.mxu0 0.0
    %142 = vmatpush1.msra.mxu0 0.0
    %143 = vmatprep.subr.mxu0 0.0
    %144 = vmatpush1.msra.mxu0 0.0
    %145 = vmatprep.subr.mxu0 0.0
    %146 = vmatpush1.msra.mxu0 0.0
    %147 = vmatprep.subr.mxu0 0.0
    %148 = vmatpush1.msra.mxu0 0.0
    %149 = vmatprep.subr.mxu0 0.0
    %150 = vmatpush1.msra.mxu0 0.0
    %151 = vmatprep.subr.mxu0 0.0
    %152 = vmatpush1.msra.mxu0 0.0
    %153 = vmatprep.subr.mxu0 0.0
    %154 = vmatpush1.msra.mxu0 0.0
    %155 = vmatprep.subr.mxu0 0.0
    %156 = vmatpush1.msra.mxu0 0.0
    %157 = vmatprep.subr.mxu0 0.0
    %158 = vmatpush1.msra.mxu0 0.0
    %159 = vmatprep.subr.mxu0 0.0
    %160 = vmatpush1.msra.mxu0 0.0
    %161 = vmatprep.subr.mxu0 0.0
    %162 = vmatpush1.msra.mxu0 0.0
    %163 = vmatprep.subr.mxu0 0.0
    %164 = vmatpush1.msra.mxu0 0.0
    %165 = vmatprep.subr.mxu0 0.0
    %166 = vmatpush1.msra.mxu0 0.0
    %167 = vmatprep.subr.mxu0 0.0
    %168 = vmatpush1.msra.mxu0 0.0
    %169 = vmatprep.subr.mxu0 0.0
    %170 = vmatpush1.msra.mxu0 0.0
    %171 = vmatprep.subr.mxu0 0.0
    %172 = vmatpush1.msra.mxu0 0.0
    %173 = vmatprep.subr.mxu0 0.0
    %174 = vmatpush1.msra.mxu0 0.0
    %175 = vmatprep.subr.mxu0 0.0
    %176 = vmatpush1.msra.mxu0 0.0
    %177 = vmatprep.subr.mxu0 0.0
    %178 = vmatpush1.msra.mxu0 0.0
    %179 = vmatprep.mubr.f32.mxu0 0.0
    %180 = vmatmul.mubr.f32.gmra.mrb[0].mxu0 %v113
    %v181 = vpop.f32.mrb[0].mxu0
    %v182 = vadd.f32 0.0, %v181
    %v183 = vpop.f32.mrb[0].mxu0
    %184 = vdwg.mxu0
    %v185 = vlog2.pop %v108
    %v186 = vmul.f32 %v185, 0.6931472
    %v187 = vsub.f32 %v186, %v182
    %v188 = vsel %vm19, %v187, 0.0
    %vm189 = vcmask 7168
    %v190 = vsel %vm189, %v188, 0.0
    %v191 = vrot.slane %v190, 4
    %v192 = vadd.f32 %v190, %v191
    %v193 = vrot.slane %v192, 2
    %v194 = vadd.f32 %v192, %v193
    %v195 = vrot.slane %v194, 1
    %v196 = vadd.f32 %v194, %v195
    %vm197 = vcmask 0
    %198 = vst.msk [vmem:[#allocation2] sm:$0x1] %vm197, %v196
    // Predicated region
    $region10: #{tpu_custom_call.1} parent=1 // pred_check
      _
    $region11: #{tpu_custom_call.1} parent=1 // pred_check_branch
      %200 = sbr.rel (0) target = $region13
    $region12: #{tpu_custom_call.1} parent=1 // pred_region
      %s202 = ssub.s32 16, 16
      %203 = vsyncadd [#allocation3], %s202
      %s205 = sshll.u32 [#allocation2], 4
      %s206 = int_to_ptr.vmem [resolvable:$true] %s205
      %208 = dma.vmem_to_hbm [thread:$0]  %s206, 16, %s2, [#allocation3]
    $region13: #{tpu_custom_call.1} parent=1 // pred_fallthru
      _
    // Predicated region
    $region14: #{tpu_custom_call.1} parent=1 // pred_check
      _
    $region15: #{tpu_custom_call.1} parent=1 // pred_check_branch
      %210 = sbr.rel (0) target = $region17
    $region16: #{tpu_custom_call.1} parent=1 // pred_region
      %211 = dma.done [#allocation3], 16
    $region17: #{tpu_custom_call.1} parent=1 // pred_fallthru
      _
    %212 = vsyncpa [#allocation3], 1

</llo_original>
